<compile_context>
chip_gen: v7x
topology: tpu7x:2x2x1
jax: 0.10.0
libtpu: 0.0.40
codegen_flags: <defaults>
</compile_context>

<pallas_src>
import math
import jax
import jax.numpy as jnp
from jax.experimental import pallas as pl
from jax.experimental.pallas import tpu as pltpu


_VMEM_LIMIT = 48 * 1024 * 1024  # above 32 MiB scoped default, below v7x 64 MiB
_CP_PARALLEL_M = pltpu.CompilerParams(
    dimension_semantics=("parallel",), vmem_limit_bytes=_VMEM_LIMIT)


def _block_m(M, cap=256):
    """Largest M-block <= cap that divides M (M is a multiple of 8 here)."""
    if M <= cap:
        return M
    bm = cap
    while bm >= 8 and M % bm != 0:
        bm //= 2
    return bm if bm >= 8 else M


def _gelu(x):
    # TODO(synk): HF 'bert-base-uncased' default is exact erf GELU; tanh
    # approximation used here (kept from the original implementation).
    return 0.5 * x * (1.0 + jnp.tanh(
        0.7978845608028654 * (x + 0.044715 * x * x * x)))


def _ln(x_f32, g, b, eps):
    mu = jnp.mean(x_f32, axis=-1, keepdims=True)
    var = jnp.mean((x_f32 - mu) ** 2, axis=-1, keepdims=True)
    return (x_f32 - mu) * jax.lax.rsqrt(var + eps) * g + b


# ----------------------------- Pallas kernels ------------------------------

def _layernorm_kernel(eps):
    def kernel(x_ref, g_ref, b_ref, o_ref):
        x = x_ref[...].astype(jnp.float32)
        o_ref[...] = _ln(x, g_ref[...], b_ref[...], eps).astype(o_ref.dtype)
    return kernel


def layernorm(x, gamma, beta, eps=1e-12, out_dtype=jnp.bfloat16):
    M, H = x.shape
    bm = _block_m(M)
    return pl.pallas_call(
        _layernorm_kernel(eps),
        grid=(M // bm,),
        out_shape=jax.ShapeDtypeStruct((M, H), out_dtype),
        in_specs=[pl.BlockSpec((bm, H), lambda i: (i, 0)),
                  pl.BlockSpec((1, H), lambda i: (0, 0)),
                  pl.BlockSpec((1, H), lambda i: (0, 0))],
        out_specs=pl.BlockSpec((bm, H), lambda i: (i, 0)),
        compiler_params=_CP_PARALLEL_M,
    )(x, gamma.reshape(1, H), beta.reshape(1, H))


def _attn_block_kernel(nh, hd, scale, eps):
    """Fused: QKV proj -> per-head attention -> out proj -> +residual -> LN."""
    H = nh * hd

    def kernel(x_ref, bias_ref, wqkv_ref, bqkv_ref, wo_ref, bo_ref,
               g_ref, be_ref, o_ref, qkv_scr):
        x = x_ref[...]                                        # (S, H) bf16
        # Fused Q/K/V projection; keep result resident in a VMEM scratch.
        qkv = jnp.dot(x, wqkv_ref[...],
                      preferred_element_type=jnp.float32) + bqkv_ref[...]
        qkv_scr[...] = qkv.astype(qkv_scr.dtype)              # (S, 3H) bf16
        bias = bias_ref[...]                                  # (1, S) f32

        ctx_parts = []
        for h in range(nh):                                   # static unroll
            q_h = qkv_scr[:, h * hd:(h + 1) * hd]             # (S, hd) bf16
            k_h = qkv_scr[:, H + h * hd:H + (h + 1) * hd]
            v_h = qkv_scr[:, 2 * H + h * hd:2 * H + (h + 1) * hd]
            # scores = q @ k^T  (contract last dims of both; no transpose op)
            s = jax.lax.dot_general(
                q_h, k_h, (((1,), (1,)), ((), ())),
                preferred_element_type=jnp.float32)           # (S, S) f32
            s = s * scale + bias                              # key-padding bias
            s = s - jnp.max(s, axis=-1, keepdims=True)
            p = jnp.exp(s)
            p = p * pl.reciprocal(jnp.sum(p, axis=-1, keepdims=True),
                                  approx=True)
            ctx_parts.append(jnp.dot(p.astype(v_h.dtype), v_h,
                                     preferred_element_type=jnp.float32))
        ctx = jnp.concatenate(ctx_parts, axis=-1)             # (S, H) f32

        y = jnp.dot(ctx.astype(wo_ref.dtype), wo_ref[...],
                    preferred_element_type=jnp.float32) + bo_ref[...]
        y = y + x.astype(jnp.float32)                         # residual
        o_ref[...] = _ln(y, g_ref[...], be_ref[...], eps).astype(o_ref.dtype)
    return kernel


def attention_block(x, attn_bias, w_qkv, b_qkv, wo, bo, gamma, beta,
                    nh, hd, eps=1e-12, out_dtype=jnp.bfloat16):
    """x: (B*S, H) bf16; attn_bias: (B, S) f32 additive mask bias."""
    M, H = x.shape
    B, S = attn_bias.shape
    assert M == B * S
    scale = 1.0 / math.sqrt(hd)
    return pl.pallas_call(
        _attn_block_kernel(nh, hd, scale, eps),
        grid=(B,),
        out_shape=jax.ShapeDtypeStruct((M, H), out_dtype),
        in_specs=[pl.BlockSpec((S, H), lambda b: (b, 0)),
                  pl.BlockSpec((1, S), lambda b: (b, 0)),
                  pl.BlockSpec((H, 3 * H), lambda b: (0, 0)),
                  pl.BlockSpec((1, 3 * H), lambda b: (0, 0)),
                  pl.BlockSpec((H, H), lambda b: (0, 0)),
                  pl.BlockSpec((1, H), lambda b: (0, 0)),
                  pl.BlockSpec((1, H), lambda b: (0, 0)),
                  pl.BlockSpec((1, H), lambda b: (0, 0))],
        out_specs=pl.BlockSpec((S, H), lambda b: (b, 0)),
        scratch_shapes=[pltpu.VMEM((S, 3 * H), jnp.bfloat16)],
        compiler_params=pltpu.CompilerParams(
            dimension_semantics=("parallel",), vmem_limit_bytes=_VMEM_LIMIT),
    )(x, attn_bias, w_qkv, b_qkv.reshape(1, 3 * H), wo, bo.reshape(1, H),
      gamma.reshape(1, H), beta.reshape(1, H))


def _ffn_res_ln_kernel(eps):
    def kernel(x_ref, w1_ref, b1_ref, w2_ref, b2_ref, g_ref, be_ref, o_ref):
        x = x_ref[...]
        h = jnp.dot(x, w1_ref[...],
                    preferred_element_type=jnp.float32) + b1_ref[...]
        h = _gelu(h)                                   # f32, stays in VMEM
        y = jnp.dot(h.astype(w2_ref.dtype), w2_ref[...],
                    preferred_element_type=jnp.float32) + b2_ref[...]
        y = y + x.astype(jnp.float32)
        o_ref[...] = _ln(y, g_ref[...], be_ref[...], eps).astype(o_ref.dtype)
    return kernel


def ffn_residual_layernorm(x, w1, b1, w2, b2, gamma, beta,
                           eps=1e-12, out_dtype=jnp.bfloat16):
    """LN(gelu(x @ w1 + b1) @ w2 + b2 + x) — whole BERT FFN block in one kernel."""
    M, H = x.shape
    I = w1.shape[1]
    bm = _block_m(M)
    return pl.pallas_call(
        _ffn_res_ln_kernel(eps),
        grid=(M // bm,),
        out_shape=jax.ShapeDtypeStruct((M, H), out_dtype),
        in_specs=[pl.BlockSpec((bm, H), lambda i: (i, 0)),
                  pl.BlockSpec((H, I), lambda i: (0, 0)),
                  pl.BlockSpec((1, I), lambda i: (0, 0)),
                  pl.BlockSpec((I, H), lambda i: (0, 0)),
                  pl.BlockSpec((1, H), lambda i: (0, 0)),
                  pl.BlockSpec((1, H), lambda i: (0, 0)),
                  pl.BlockSpec((1, H), lambda i: (0, 0))],
        out_specs=pl.BlockSpec((bm, H), lambda i: (i, 0)),
        compiler_params=_CP_PARALLEL_M,
    )(x, w1, b1.reshape(1, I), w2, b2.reshape(1, H),
      gamma.reshape(1, H), beta.reshape(1, H))


def _pooler_heads_kernel():
    def kernel(cls_ref, pw_ref, pb_ref, hw_ref, hb_ref, o_ref):
        pooled = jnp.dot(cls_ref[...], pw_ref[...],
                         preferred_element_type=jnp.float32) + pb_ref[...]
        pooled = jnp.tanh(pooled)
        y = jnp.dot(pooled.astype(hw_ref.dtype), hw_ref[...],
                    preferred_element_type=jnp.float32) + hb_ref[...]
        o_ref[...] = y.astype(o_ref.dtype)
    return kernel


def pooler_and_heads(cls, pool_w, pool_b, head_w, head_b):
    """tanh(cls @ pool_w + pool_b) @ head_w + head_b with N padded to 128 lanes."""
    B, H = cls.shape
    N = head_w.shape[1]
    return pl.pallas_call(
        _pooler_heads_kernel(),
        out_shape=jax.ShapeDtypeStruct((B, N), jnp.float32),
        in_specs=[pl.BlockSpec((B, H), lambda: (0, 0)),
                  pl.BlockSpec((H, H), lambda: (0, 0)),
                  pl.BlockSpec((1, H), lambda: (0, 0)),
                  pl.BlockSpec((H, N), lambda: (0, 0)),
                  pl.BlockSpec((1, N), lambda: (0, 0))],
        out_specs=pl.BlockSpec((B, N), lambda: (0, 0)),
    )(cls, pool_w, pool_b.reshape(1, H), head_w, head_b.reshape(1, N))


# ---------------------------- model definition -----------------------------

class Config:
    vocab_size = 128       # reduced (real BERT: 30522)
    hidden = 768           # must stay 768 to match the 768->5/5/1 heads
    layers = 2             # reduced (real BERT-base: 12)
    heads = 12
    head_dim = 64
    intermediate = 3072
    max_pos = 32
    type_vocab = 2
    heads_pad = 128        # lane-dense padded width for the fused 5+5+1 heads


def init_params(key, cfg):
    keys = iter(jax.random.split(key, 256))
    nrm = lambda shape: 0.02 * jax.random.normal(next(keys), shape, jnp.float32)
    H, I = cfg.hidden, cfg.intermediate
    bf = jnp.bfloat16
    params = {
        "word_emb": nrm((cfg.vocab_size, H)),
        "pos_emb": nrm((cfg.max_pos, H)),
        "type_emb": nrm((cfg.type_vocab, H)),
        "emb_ln_g": jnp.ones((H,), jnp.float32),
        "emb_ln_b": jnp.zeros((H,), jnp.float32),
        "pool_w": nrm((H, H)).astype(bf),
        "pool_b": jnp.zeros((H,), jnp.float32),
        "layers": [],
    }
    # Fused heads: concat (768,5)+(768,5)+(768,1) -> (768,11), pad N to 128.
    head_w = jnp.concatenate([nrm((H, 5)), nrm((H, 5)), nrm((H, 1))], axis=1)
    params["head_w"] = jnp.pad(head_w, ((0, 0), (0, cfg.heads_pad - 11))).astype(bf)
    params["head_b"] = jnp.zeros((cfg.heads_pad,), jnp.float32)
    for _ in range(cfg.layers):
        wq, wk, wv = nrm((H, H)), nrm((H, H)), nrm((H, H))
        params["layers"].append({
            "w_qkv": jnp.concatenate([wq, wk, wv], axis=1).astype(bf),  # (H, 3H)
            "b_qkv": jnp.zeros((3 * H,), jnp.float32),
            "wo": nrm((H, H)).astype(bf), "bo": jnp.zeros((H,), jnp.float32),
            "ln1_g": jnp.ones((H,), jnp.float32),
            "ln1_b": jnp.zeros((H,), jnp.float32),
            "w1": nrm((H, I)).astype(bf), "b1": jnp.zeros((I,), jnp.float32),
            "w2": nrm((I, H)).astype(bf), "b2": jnp.zeros((H,), jnp.float32),
            "ln2_g": jnp.ones((H,), jnp.float32),
            "ln2_b": jnp.zeros((H,), jnp.float32),
        })
    return params


def review_model_forward(params, input_ids, attention_mask, cfg):
    B, S = input_ids.shape
    H, nh, hd = cfg.hidden, cfg.heads, cfg.head_dim

    # Embeddings (gather is glue in plain JAX) + Pallas layernorm -> bf16 activations.
    pos_ids = jnp.arange(S)
    emb = (jnp.take(params["word_emb"], input_ids, axis=0)
           + params["pos_emb"][pos_ids][None, :, :]
           + params["type_emb"][0][None, None, :])
    x = layernorm(emb.reshape(B * S, H), params["emb_ln_g"], params["emb_ln_b"])

    # Precompute HF-BERT additive attention bias once: 0 keep, -10000 pad.
    attn_bias = (1.0 - attention_mask.astype(jnp.float32)) * (-10000.0)  # (B, S)

    for lp in params["layers"]:
        # QKV proj + multi-head attention + out proj + residual + LN (one kernel).
        x = attention_block(x, attn_bias, lp["w_qkv"], lp["b_qkv"],
                            lp["wo"], lp["bo"], lp["ln1_g"], lp["ln1_b"],
                            nh, hd)
        # FFN w1 + GELU + w2 + residual + LN (one kernel; 3072-wide stays in VMEM).
        x = ffn_residual_layernorm(x, lp["w1"], lp["b1"], lp["w2"], lp["b2"],
                                   lp["ln2_g"], lp["ln2_b"])

    # BERT pooler (tanh) + the three heads, fused, lane-dense N=128 output.
    cls = x.reshape(B, S, H)[:, 0, :]                        # (B, H) bf16
    logits = pooler_and_heads(cls, params["pool_w"], params["pool_b"],
                              params["head_w"], params["head_b"])  # (B, 128) f32
    food_logits = logits[:, 0:5]
    delivery_logits = logits[:, 5:10]
    approval_logit = logits[:, 10:11]
    return food_logits, delivery_logits, approval_logit


if __name__ == "__main__":
    cfg = Config()
    key = jax.random.PRNGKey(0)
    k_param, k_ids = jax.random.split(key)

    B, S = 2, 8
    params = init_params(k_param, cfg)
    input_ids = jax.random.randint(k_ids, (B, S), 0, cfg.vocab_size, dtype=jnp.int32)
    attention_mask = jnp.concatenate(
        [jnp.ones((B, S - 2), jnp.int32), jnp.zeros((B, 2), jnp.int32)], axis=1)

    food, delivery, approval = review_model_forward(params, input_ids,
                                                    attention_mask, cfg)
    jax.block_until_ready((food, delivery, approval))

    assert food.shape == (B, 5)
    assert delivery.shape == (B, 5)
    assert approval.shape == (B, 1)
    print("KERNEL_OK")
</pallas_src>

<mosaic_0001>
module attributes {stable_mosaic.version = 11 : i64} {
  func.func @kernel(%arg0: i32, %arg1: memref<16x768xf32, #tpu.memory_space<vmem>>, %arg2: memref<1x768xf32, #tpu.memory_space<vmem>>, %arg3: memref<1x768xf32, #tpu.memory_space<vmem>>, %arg4: memref<16x768xbf16, #tpu.memory_space<vmem>>) attributes {dimension_semantics = [#tpu.dimension_semantics<parallel>], iteration_bounds = array<i64: 1>, scalar_prefetch = 0 : i64, scratch_operands = 0 : i64, tpu.core_type = #tpu.core_type<tc>, window_params = [{transform_indices = @transform_0, window_bounds = array<i64: 16, 768>}, {pipeline_mode = #tpu.pipeline_mode<synchronous>, transform_indices = @transform_1, window_bounds = array<i64: 1, 768>}, {pipeline_mode = #tpu.pipeline_mode<synchronous>, transform_indices = @transform_2, window_bounds = array<i64: 1, 768>}, {transform_indices = @transform_3, window_bounds = array<i64: 16, 768>}]} {
    %c0 = arith.constant 0 : index
    %c0_0 = arith.constant 0 : index
    %0 = vector.load %arg1[%c0, %c0_0] : memref<16x768xf32, #tpu.memory_space<vmem>>, vector<16x768xf32>
    %c0_1 = arith.constant 0 : index
    %c0_2 = arith.constant 0 : index
    %1 = vector.load %arg2[%c0_1, %c0_2] : memref<1x768xf32, #tpu.memory_space<vmem>>, vector<1x768xf32>
    %c0_3 = arith.constant 0 : index
    %c0_4 = arith.constant 0 : index
    %2 = vector.load %arg3[%c0_3, %c0_4] : memref<1x768xf32, #tpu.memory_space<vmem>>, vector<1x768xf32>
    %cst = arith.constant dense<0.000000e+00> : vector<16xf32>
    %3 = vector.multi_reduction <add>, %0, %cst [1] : vector<16x768xf32> to vector<16xf32>
    %4 = vector.shape_cast %3 : vector<16xf32> to vector<16x1xf32>
    %cst_5 = arith.constant 7.680000e+02 : f32
    %5 = vector.broadcast %cst_5 : f32 to vector<16x1xf32>
    %6 = arith.divf %4, %5 : vector<16x1xf32>
    %7 = vector.broadcast %6 : vector<16x1xf32> to vector<16x768xf32>
    %8 = arith.subf %0, %7 : vector<16x768xf32>
    %9 = arith.mulf %8, %8 : vector<16x768xf32>
    %cst_6 = arith.constant dense<0.000000e+00> : vector<16xf32>
    %10 = vector.multi_reduction <add>, %9, %cst_6 [1] : vector<16x768xf32> to vector<16xf32>
    %11 = vector.shape_cast %10 : vector<16xf32> to vector<16x1xf32>
    %cst_7 = arith.constant 7.680000e+02 : f32
    %12 = vector.broadcast %cst_7 : f32 to vector<16x1xf32>
    %13 = arith.divf %11, %12 : vector<16x1xf32>
    %14 = vector.broadcast %6 : vector<16x1xf32> to vector<16x768xf32>
    %15 = arith.subf %0, %14 : vector<16x768xf32>
    %cst_8 = arith.constant 9.99999996E-13 : f32
    %16 = vector.broadcast %cst_8 : f32 to vector<16x1xf32>
    %17 = arith.addf %13, %16 : vector<16x1xf32>
    %18 = math.rsqrt %17 : vector<16x1xf32>
    %19 = vector.broadcast %18 : vector<16x1xf32> to vector<16x768xf32>
    %20 = arith.mulf %15, %19 : vector<16x768xf32>
    %21 = vector.broadcast %1 : vector<1x768xf32> to vector<16x768xf32>
    %22 = arith.mulf %20, %21 : vector<16x768xf32>
    %23 = vector.broadcast %2 : vector<1x768xf32> to vector<16x768xf32>
    %24 = arith.addf %22, %23 : vector<16x768xf32>
    %25 = arith.truncf %24 : vector<16x768xf32> to vector<16x768xbf16>
    %c0_9 = arith.constant 0 : index
    %c0_10 = arith.constant 0 : index
    %26 = vector.load %arg4[%c0_9, %c0_10] : memref<16x768xbf16, #tpu.memory_space<vmem>>, vector<16x768xbf16>
    tpu.vector_store %arg4[%c0_9, %c0_10], %25 {strides = array<i32>} : memref<16x768xbf16, #tpu.memory_space<vmem>>, vector<16x768xbf16>,
    return
  }
  func.func @transform_0(%arg0: i32) -> (i32, i32) {
    %c0_i32 = arith.constant 0 : i32
    %c0_i32_0 = arith.constant 0 : i32
    return %arg0, %c0_i32 : i32, i32
  }
  func.func @transform_1(%arg0: i32) -> (i32, i32) {
    %c0_i32 = arith.constant 0 : i32
    %c0_i32_0 = arith.constant 0 : i32
    %c0_i32_1 = arith.constant 0 : i32
    return %c0_i32, %c0_i32_0 : i32, i32
  }
  func.func @transform_2(%arg0: i32) -> (i32, i32) {
    %c0_i32 = arith.constant 0 : i32
    %c0_i32_0 = arith.constant 0 : i32
    %c0_i32_1 = arith.constant 0 : i32
    return %c0_i32, %c0_i32_0 : i32, i32
  }
  func.func @transform_3(%arg0: i32) -> (i32, i32) {
    %c0_i32 = arith.constant 0 : i32
    %c0_i32_0 = arith.constant 0 : i32
    return %arg0, %c0_i32 : i32, i32
  }
}

</mosaic_0001>

<llo_original>
// kernel: tpu_custom_call.1
$region0: #{tpu_custom_call.1}
  #allocation0 [shape = 'u32[]', space=smem, size = 0x4, offset = 0x4, fixed_abs, tag = 'smem constant byte address 0x4 - core index']
  #allocation1 [shape = 'u32[144,128]{1,0:T(1,128)}', space=vmem, size = 0x12000, scoped, tag = 'internal scratch']
  %s0 = inlined_call_operand.hbm [shape: f32[16,768], index: 0, kind: input, shape index: {}]
  %s1 = inlined_call_operand.hbm [shape: f32[1,768], index: 1, kind: input, shape index: {}]
  %s2 = inlined_call_operand.vmem [shape: f32[1,768], index: 2, kind: input, shape index: {}]
  %s3 = inlined_call_operand.hbm [shape: bf16[16,768], index: 3, kind: output, shape index: {}]
  %s4 = sld [smem:[#allocation0]]
  $region30: #{tpu_custom_call.1} parent=0
    _
  %s6 = ssub.s32 1, %s4
  %s7 = scalar_select 0, %s6, %s4
  $region1: #{tpu_custom_call.1} parent=0
    #allocation2 [shape = 'u8[49152]{0}', space=vmem, size = 0xc000, scoped, tag = 'input window, operand 0, single buffered']
    #allocation3 [shape = 's32[1]{0}', space=sflag, size = 0x4, scoped, tag = 'scoped memory for tpu_custom_call.1']
    #allocation4 [shape = 's32[1]{0}', space=sflag, size = 0x4, scoped, tag = 'scoped memory for tpu_custom_call.1']
    #allocation5 [shape = 'u8[3072]{0}', space=vmem, size = 0xc00, scoped, tag = 'input window, operand 1, single buffered']
    #allocation6 [shape = 's32[1]{0}', space=sflag, size = 0x4, scoped, tag = 'scoped memory for tpu_custom_call.1']
    #allocation7 [shape = 'u8[24576]{0}', space=vmem, size = 0x6000, scoped, tag = 'output window, operand 0, single buffered']
    %8 = vsyncpa [#allocation3], 0
    %9 = vsyncpa [#allocation6], 0
    %10 = vsyncpa [#allocation4], 0
    // Predicated region
    $region2: #{tpu_custom_call.1} parent=1 // pred_check
      _
    $region3: #{tpu_custom_call.1} parent=1 // pred_check_branch
      %12 = sbr.rel (0) target = $region5
    $region4: #{tpu_custom_call.1} parent=1 // pred_region
      %s14 = ssub.s32 1536, 1536
      %15 = vsyncadd [#allocation3], %s14
      %s16 = sshll.u32 [#allocation2], 4
      %s17 = int_to_ptr.vmem [resolvable:$true] %s16
      %22 = dma.hbm_to_vmem [thread:$0]  %s0, 1536, %s17, [#allocation3], 768, 768, 48
    $region5: #{tpu_custom_call.1} parent=1 // pred_fallthru
      _
    // Predicated region
    $region6: #{tpu_custom_call.1} parent=1 // pred_check
      _
    $region7: #{tpu_custom_call.1} parent=1 // pred_check_branch
      %24 = sbr.rel (0) target = $region9
    $region8: #{tpu_custom_call.1} parent=1 // pred_region
      %s26 = ssub.s32 96, 96
      %27 = vsyncadd [#allocation6], %s26
      %s29 = sshll.u32 [#allocation5], 4
      %s30 = int_to_ptr.vmem [resolvable:$true] %s29
      %32 = dma.hbm_to_vmem [thread:$0]  %s1, 96, %s30, [#allocation6]
    $region9: #{tpu_custom_call.1} parent=1 // pred_fallthru
      _
    // Predicated region
    $region10: #{tpu_custom_call.1} parent=1 // pred_check
      _
    $region11: #{tpu_custom_call.1} parent=1 // pred_check_branch
      %34 = sbr.rel (0) target = $region13
    $region12: #{tpu_custom_call.1} parent=1 // pred_region
      _
    $region13: #{tpu_custom_call.1} parent=1 // pred_fallthru
      _
    // Predicated region
    $region14: #{tpu_custom_call.1} parent=1 // pred_check
      _
    $region15: #{tpu_custom_call.1} parent=1 // pred_check_branch
      %36 = sbr.rel (0) target = $region17
    $region16: #{tpu_custom_call.1} parent=1 // pred_region
      %37 = dma.done [#allocation3], 1536
    $region17: #{tpu_custom_call.1} parent=1 // pred_fallthru
      _
    // Predicated region
    $region18: #{tpu_custom_call.1} parent=1 // pred_check
      _
    $region19: #{tpu_custom_call.1} parent=1 // pred_check_branch
      %39 = sbr.rel (0) target = $region21
    $region20: #{tpu_custom_call.1} parent=1 // pred_region
      %40 = dma.done [#allocation6], 96
    $region21: #{tpu_custom_call.1} parent=1 // pred_fallthru
      _
    %v41 = vld [vmem:[#allocation2] sm:$0xff]
    %v42 = vld [vmem:[#allocation2 + $0x8] sm:$0xff]
    %v43 = vld [vmem:[#allocation2 + $0x10] sm:$0xff]
    %v44 = vld [vmem:[#allocation2 + $0x18] sm:$0xff]
    %v45 = vld [vmem:[#allocation2 + $0x20] sm:$0xff]
    %v46 = vld [vmem:[#allocation2 + $0x28] sm:$0xff]
    %v47 = vld [vmem:[#allocation2 + $0x30] sm:$0xff]
    %v48 = vld [vmem:[#allocation2 + $0x38] sm:$0xff]
    %v49 = vld [vmem:[#allocation2 + $0x40] sm:$0xff]
    %v50 = vld [vmem:[#allocation2 + $0x48] sm:$0xff]
    %v51 = vld [vmem:[#allocation2 + $0x50] sm:$0xff]
    %v52 = vld [vmem:[#allocation2 + $0x58] sm:$0xff]
    %v53 = vld [vmem:[#allocation5] sm:$0x3f]
    %v54 = vld [vmem:[%s2] sm:$0x3f]
    %v55 = vadd.f32 %v41, %v42
    %v56 = vadd.f32 %v55, %v43
    %v57 = vadd.f32 %v56, %v44
    %v58 = vadd.f32 %v57, %v45
    %v59 = vadd.f32 %v58, %v46
    %60 = vadd.xlane.f32.xlu0 %v59
    %v61 = vpop.xlane.xlu0 %60
    %v62 = vadd.f32 %v47, %v48
    %v63 = vadd.f32 %v62, %v49
    %v64 = vadd.f32 %v63, %v50
    %v65 = vadd.f32 %v64, %v51
    %v66 = vadd.f32 %v65, %v52
    %67 = vadd.xlane.f32.xlu0 %v66
    %v68 = vpop.xlane.xlu0 %67
    %v69 = vrcp.pop 768.0
    %v70 = vmul.f32 %v61, %v69
    %v71 = vmul.f32 %v68, %v69
    %v72 = vsub.f32 %v41, %v70
    %v73 = vsub.f32 %v42, %v70
    %v74 = vsub.f32 %v43, %v70
    %v75 = vsub.f32 %v44, %v70
    %v76 = vsub.f32 %v45, %v70
    %v77 = vsub.f32 %v46, %v70
    %v78 = vsub.f32 %v47, %v71
    %v79 = vsub.f32 %v48, %v71
    %v80 = vsub.f32 %v49, %v71
    %v81 = vsub.f32 %v50, %v71
    %v82 = vsub.f32 %v51, %v71
    %v83 = vsub.f32 %v52, %v71
    %v84 = vmul.f32 %v72, %v72
    %v85 = vmul.f32 %v73, %v73
    %v86 = vmul.f32 %v74, %v74
    %v87 = vmul.f32 %v75, %v75
    %v88 = vmul.f32 %v76, %v76
    %v89 = vmul.f32 %v77, %v77
    %v90 = vmul.f32 %v78, %v78
    %v91 = vmul.f32 %v79, %v79
    %v92 = vmul.f32 %v80, %v80
    %v93 = vmul.f32 %v81, %v81
    %v94 = vmul.f32 %v82, %v82
    %v95 = vmul.f32 %v83, %v83
    %v96 = vadd.f32 %v84, %v85
    %v97 = vadd.f32 %v96, %v86
    %v98 = vadd.f32 %v97, %v87
    %v99 = vadd.f32 %v98, %v88
    %v100 = vadd.f32 %v99, %v89
    %101 = vadd.xlane.f32.xlu0 %v100
    %v102 = vpop.xlane.xlu0 %101
    %v103 = vadd.f32 %v90, %v91
    %v104 = vadd.f32 %v103, %v92
    %v105 = vadd.f32 %v104, %v93
    %v106 = vadd.f32 %v105, %v94
    %v107 = vadd.f32 %v106, %v95
    %108 = vadd.xlane.f32.xlu0 %v107
    %v109 = vpop.xlane.xlu0 %108
    %v110 = vmul.f32 %v102, %v69
    %v111 = vmul.f32 %v109, %v69
    %v112 = vadd.f32 %v110, 1e-12
    %v113 = vadd.f32 %v111, 1e-12
    %v114 = vrsqrt.pop %v112
    %v115 = vrsqrt.pop %v113
    %v116 = vmul.f32 %v72, %v114
    %v117 = vmul.f32 %v73, %v114
    %v118 = vmul.f32 %v74, %v114
    %v119 = vmul.f32 %v75, %v114
    %v120 = vmul.f32 %v76, %v114
    %v121 = vmul.f32 %v77, %v114
    %v122 = vmul.f32 %v78, %v115
    %v123 = vmul.f32 %v79, %v115
    %v124 = vmul.f32 %v80, %v115
    %v125 = vmul.f32 %v81, %v115
    %v126 = vmul.f32 %v82, %v115
    %v127 = vmul.f32 %v83, %v115
    %v129 = vlaneseq
    %v130 = vshrl.u32 %v129, 7
    %v131 = vsub.s32 0, %v130
    %v132 = vrot.slane %v53, %v131
    %v133 = vlaneseq
    %v134 = vshrl.u32 %v133, 7
    %v135 = vsub.s32 1, %v134
    %v136 = vrot.slane %v53, %v135
    %v137 = vlaneseq
    %v138 = vshrl.u32 %v137, 7
    %v139 = vsub.s32 2, %v138
    %v140 = vrot.slane %v53, %v139
    %v141 = vlaneseq
    %v142 = vshrl.u32 %v141, 7
    %v143 = vsub.s32 3, %v142
    %v144 = vrot.slane %v53, %v143
    %v145 = vlaneseq
    %v146 = vshrl.u32 %v145, 7
    %v147 = vsub.s32 4, %v146
    %v148 = vrot.slane %v53, %v147
    %v149 = vlaneseq
    %v150 = vshrl.u32 %v149, 7
    %v151 = vsub.s32 5, %v150
    %v152 = vrot.slane %v53, %v151
    %v159 = vmul.f32 %v116, %v132
    %v160 = vmul.f32 %v117, %v136
    %v161 = vmul.f32 %v118, %v140
    %v162 = vmul.f32 %v119, %v144
    %v163 = vmul.f32 %v120, %v148
    %v164 = vmul.f32 %v121, %v152
    %v165 = vmul.f32 %v122, %v132
    %v166 = vmul.f32 %v123, %v136
    %v167 = vmul.f32 %v124, %v140
    %v168 = vmul.f32 %v125, %v144
    %v169 = vmul.f32 %v126, %v148
    %v170 = vmul.f32 %v127, %v152
    %v172 = vlaneseq
    %v173 = vshrl.u32 %v172, 7
    %v174 = vsub.s32 0, %v173
    %v175 = vrot.slane %v54, %v174
    %v176 = vlaneseq
    %v177 = vshrl.u32 %v176, 7
    %v178 = vsub.s32 1, %v177
    %v179 = vrot.slane %v54, %v178
    %v180 = vlaneseq
    %v181 = vshrl.u32 %v180, 7
    %v182 = vsub.s32 2, %v181
    %v183 = vrot.slane %v54, %v182
    %v184 = vlaneseq
    %v185 = vshrl.u32 %v184, 7
    %v186 = vsub.s32 3, %v185
    %v187 = vrot.slane %v54, %v186
    %v188 = vlaneseq
    %v189 = vshrl.u32 %v188, 7
    %v190 = vsub.s32 4, %v189
    %v191 = vrot.slane %v54, %v190
    %v192 = vlaneseq
    %v193 = vshrl.u32 %v192, 7
    %v194 = vsub.s32 5, %v193
    %v195 = vrot.slane %v54, %v194
    %v202 = vadd.f32 %v159, %v175
    %v203 = vadd.f32 %v160, %v179
    %v204 = vadd.f32 %v161, %v183
    %v205 = vadd.f32 %v162, %v187
    %v206 = vadd.f32 %v163, %v191
    %v207 = vadd.f32 %v164, %v195
    %v208 = vadd.f32 %v165, %v175
    %v209 = vadd.f32 %v166, %v179
    %v210 = vadd.f32 %v167, %v183
    %v211 = vadd.f32 %v168, %v187
    %v212 = vadd.f32 %v169, %v191
    %v213 = vadd.f32 %v170, %v195
    %v214 = vpack.c.bf16 %v208, %v202
    %v215 = vpack.c.bf16 %v209, %v203
    %v216 = vpack.c.bf16 %v210, %v204
    %v217 = vpack.c.bf16 %v211, %v205
    %v218 = vpack.c.bf16 %v212, %v206
    %v219 = vpack.c.bf16 %v213, %v207
    %v226 = vunpack.c.l.b16 %v214
    %v227 = vunpack.c.l.b16 %v215
    %v228 = vunpack.c.l.b16 %v216
    %v229 = vunpack.c.l.b16 %v217
    %v230 = vunpack.c.l.b16 %v218
    %v231 = vunpack.c.l.b16 %v219
    %v232 = vunpack.c.h.b16 %v214
    %v233 = vunpack.c.h.b16 %v215
    %v234 = vunpack.c.h.b16 %v216
    %v235 = vunpack.c.h.b16 %v217
    %v236 = vunpack.c.h.b16 %v218
    %v237 = vunpack.c.h.b16 %v219
    %v238 = vpack.c.b16 %v227, %v226
    %v239 = vpack.c.b16 %v229, %v228
    %v240 = vpack.c.b16 %v231, %v230
    %v241 = vpack.c.b16 %v233, %v232
    %v242 = vpack.c.b16 %v235, %v234
    %v243 = vpack.c.b16 %v237, %v236
    %250 = vst [vmem:[#allocation7] sm:$0xff] %v238
    %251 = vst [vmem:[#allocation7 + $0x8] sm:$0xff] %v239
    %252 = vst [vmem:[#allocation7 + $0x10] sm:$0xff] %v240
    %253 = vst [vmem:[#allocation7 + $0x18] sm:$0xff] %v241
    %254 = vst [vmem:[#allocation7 + $0x20] sm:$0xff] %v242
    %255 = vst [vmem:[#allocation7 + $0x28] sm:$0xff] %v243
    // Predicated region
    $region22: #{tpu_custom_call.1} parent=1 // pred_check
      _
    $region23: #{tpu_custom_call.1} parent=1 // pred_check_branch
      %257 = sbr.rel (0) target = $region25
    $region24: #{tpu_custom_call.1} parent=1 // pred_region
      %s259 = ssub.s32 768, 768
      %260 = vsyncadd [#allocation4], %s259
      %s261 = sshll.u32 [#allocation7], 4
      %s262 = int_to_ptr.vmem [resolvable:$true] %s261
      %267 = dma.vmem_to_hbm [thread:$0]  %s262, 768, %s3, [#allocation4], 384, 384, 24
    $region25: #{tpu_custom_call.1} parent=1 // pred_fallthru
      _
    // Predicated region
    $region26: #{tpu_custom_call.1} parent=1 // pred_check
      _
    $region27: #{tpu_custom_call.1} parent=1 // pred_check_branch
      %269 = sbr.rel (0) target = $region29
    $region28: #{tpu_custom_call.1} parent=1 // pred_region
      %270 = dma.done [#allocation4], 768
    $region29: #{tpu_custom_call.1} parent=1 // pred_fallthru
      _
    %271 = vsyncpa [#allocation3], 1
    %272 = vsyncpa [#allocation6], 1
    %273 = vsyncpa [#allocation4], 1

</llo_original>
